<compile_context>
chip_gen: v7x
topology: tpu7x:2x2x1
jax: 0.10.0
libtpu: 0.0.40
codegen_flags: <defaults>
</compile_context>

<pallas_src>
import math
import numpy as np
import jax
import jax.numpy as jnp
from jax.experimental import pallas as pl
from jax.experimental.pallas import tpu as pltpu


def _bilinear_matrix(n_out: int, n_in: int) -> np.ndarray:
    """Interpolation matrix M (n_out, n_in) matching
    F.interpolate(mode='bilinear', align_corners=False) along one axis:
    out = M @ in.  Every row sums to 1."""
    scale = n_in / n_out
    dst = np.arange(n_out, dtype=np.float64)
    src = np.maximum((dst + 0.5) * scale - 0.5, 0.0)  # torch clamps negatives
    i0 = np.minimum(np.floor(src).astype(np.int64), n_in - 1)
    i1 = np.minimum(i0 + 1, n_in - 1)
    w1 = src - i0
    w0 = 1.0 - w1
    m = np.zeros((n_out, n_in), dtype=np.float64)
    rows = np.arange(n_out)
    m[rows, i0] += w0
    m[rows, i1] += w1
    return m.astype(np.float32)


def _choose_tile(s: int, requested: int, align: int) -> int:
    """Smallest multiple of `align` that divides `s` and is >= `requested`;
    falls back to the full extent `s`."""
    for d in range(align, s + 1, align):
        if s % d == 0 and d >= requested:
            return d
    return s


def coreml_preprocess(input_image,
                      longest_side: int = 1024,
                      pixel_mean=(123.675, 116.28, 103.53),
                      pixel_std=(58.395, 57.12, 57.375),
                      out_tile: int = 256):
    """(H, W, C) image -> (1, C, S, S) resized + normalized + padded (NCHW)."""
    H, W, C = input_image.shape
    S = longest_side
    assert C == len(tuple(pixel_mean)) == len(tuple(pixel_std))

    # resize_longest_image_size (torch.floor(x + 0.5); static shape math).
    scale = S / max(H, W)
    Hout = int(math.floor(scale * H + 0.5))
    Wout = int(math.floor(scale * W + 0.5))

    # Contraction order: column-first when the image is wider than tall
    # (smaller intermediate, fewer MACs).  Shape facts used below:
    #   W >  H  =>  Wout == S (no padded cols), Hout <= S (padded rows)
    #   H >= W  =>  Hout == S (no padded rows), Wout <= S (padded cols)
    col_first = W > H

    # Row-interp matrix, DENSE (Hout, H): no MXU work against zero rows.
    r_mat = jnp.asarray(_bilinear_matrix(Hout, H))               # (Hout, H)
    # Column-interp matrix, pre-transposed and zero-padded to S columns so the
    # output store is lane-dense and the right pad comes out exactly 0.
    ct_np = np.zeros((W, S), dtype=np.float32)
    ct_np[:, :Wout] = _bilinear_matrix(Wout, W).T
    ct_pad = jnp.asarray(ct_np)                                   # (W, S)

    mean = jnp.asarray(pixel_mean, dtype=jnp.float32)                     # (C,)
    inv_std = jnp.asarray(1.0 / np.asarray(pixel_std, np.float64),
                          dtype=jnp.float32)                              # (C,)

    # HWC -> CHW.  uint8 pixels are exact in bf16 -> 2 B/px HBM/VMEM traffic.
    x_chw = jnp.transpose(input_image, (2, 0, 1))
    if x_chw.dtype == jnp.uint8:
        x_chw = x_chw.astype(jnp.bfloat16)

    if col_first:
        # Tile the OUTPUT COLUMNS (lane axis) -> tile must be a multiple of 128.
        T = _choose_tile(S, out_tile, 128)

        def kernel(x_ref, r_ref, ct_ref, mean_ref, inv_std_ref, o_ref):
            c = pl.program_id(0)
            x = x_ref[0].astype(jnp.float32)                              # (H, W)
            tmp = jnp.dot(x, ct_ref[...],
                          preferred_element_type=jnp.float32)             # (H, T)
            # Fold normalization through the linear resize: every valid column
            # of ct sums to 1 (Wout == S here) and every row of r sums to 1, so
            # r @ ((x @ ct - mean) * inv_std) == (r @ x @ ct - mean) * inv_std.
            tmp = (tmp - mean_ref[c]) * inv_std_ref[c]
            band = jnp.dot(r_ref[...], tmp,
                           preferred_element_type=jnp.float32)            # (Hout, T)
            o_ref[0, :Hout, :] = band                 # full-width, lane-dense
            if Hout < S:                              # bottom pad: exact zeros
                o_ref[0, Hout:, :] = jnp.zeros((S - Hout, T), jnp.float32)

        r_spec = pl.BlockSpec((Hout, H), lambda c, t: (0, 0))
        ct_spec = pl.BlockSpec((W, T), lambda c, t: (0, t))
        out_spec = pl.BlockSpec((1, S, T), lambda c, t: (c, 0, t))
    else:
        # Tile the OUTPUT ROWS (sublane axis) -> tile must be a multiple of 8.
        T = _choose_tile(S, out_tile, 8)

        def kernel(x_ref, r_ref, ct_ref, mean_ref, inv_std_ref, o_ref):
            c = pl.program_id(0)
            x = x_ref[0].astype(jnp.float32)                              # (H, W)
            tmp = jnp.dot(r_ref[...], x,
                          preferred_element_type=jnp.float32)             # (T, W)
            # Normalize the small (T, W) intermediate; valid columns of ct sum
            # to 1 so the result equals (resize - mean) / std, and the zero
            # columns of ct keep the right pad exactly 0.
            tmp = (tmp - mean_ref[c]) * inv_std_ref[c]
            o_ref[0] = jnp.dot(tmp, ct_ref[...],
                               preferred_element_type=jnp.float32)        # (T, S)

        r_spec = pl.BlockSpec((T, H), lambda c, t: (t, 0))
        ct_spec = pl.BlockSpec((W, S), lambda c, t: (0, 0))
        out_spec = pl.BlockSpec((1, T, S), lambda c, t: (c, t, 0))

    out = pl.pallas_call(
        kernel,
        out_shape=jax.ShapeDtypeStruct((C, S, S), jnp.float32),
        grid_spec=pltpu.PrefetchScalarGridSpec(
            num_scalar_prefetch=0,
            grid=(C, S // T),
            in_specs=[
                pl.BlockSpec((1, H, W), lambda c, t: (c, 0, 0)),     # channel plane
                r_spec,                                              # row interp
                ct_spec,                                             # col interp^T
                pl.BlockSpec(memory_space=pltpu.MemorySpace.SMEM),   # pixel_mean
                pl.BlockSpec(memory_space=pltpu.MemorySpace.SMEM),   # 1/pixel_std
            ],
            out_specs=out_spec,
        ),
        compiler_params=pltpu.CompilerParams(
            # Every (channel, tile) step is independent -> both axes parallel
            # (even megacore split on v7x, harmless on 1-TC v5e/v6e).
            dimension_semantics=("parallel", "parallel"),
            # The tiled working set is small on every generation; 48 MiB keeps
            # headroom under v7x's 64 MiB physical VMEM.
            vmem_limit_bytes=48 * 1024 * 1024,
        ),
    )(x_chw, r_mat, ct_pad, mean, inv_std)

    return out[None]   # (1, C, S, S) NCHW, matching the PyTorch module output


def _reference(img_hwc: np.ndarray, S: int,
               pixel_mean=(123.675, 116.28, 103.53),
               pixel_std=(58.395, 57.12, 57.375)):
    """float64 numpy reference in the PyTorch op order: resize -> norm -> pad."""
    H, W, C = img_hwc.shape
    scale = S / max(H, W)
    Hout = int(math.floor(scale * H + 0.5))
    Wout = int(math.floor(scale * W + 0.5))
    Rm = _bilinear_matrix(Hout, H).astype(np.float64)
    Cm = _bilinear_matrix(Wout, W).astype(np.float64)
    x = np.transpose(img_hwc.astype(np.float64), (2, 0, 1))       # (C, H, W)
    resized = np.einsum('oh,chw,pw->cop', Rm, x, Cm)
    mean = np.asarray(pixel_mean, np.float64)[:, None, None]
    std = np.asarray(pixel_std, np.float64)[:, None, None]
    ref = np.zeros((C, S, S), dtype=np.float64)
    ref[:, :Hout, :Wout] = (resized - mean) / std
    return ref, Hout, Wout


if __name__ == "__main__":
    key = jax.random.PRNGKey(0)
    cases = [
        # (H, W, longest_side, out_tile)
        (8, 20, 16, 16),     # wide -> column-first, zero bottom rows
        (20, 8, 16, 8),      # tall -> row-first, 2 row tiles, zero right cols
        (30, 50, 256, 128),  # wide -> column-first, 2 column tiles
    ]
    for (H, W, S, tile) in cases:
        key, sub = jax.random.split(key)
        # Production dtype path: uint8 HWC image.
        img = jax.random.randint(sub, (H, W, 3), 0, 256,
                                 dtype=jnp.int32).astype(jnp.uint8)

        out = coreml_preprocess(img, longest_side=S, out_tile=tile)
        out = jax.block_until_ready(out)
        assert out.shape == (1, 3, S, S)

        ref, Hout, Wout = _reference(np.asarray(img), S)
        got = np.asarray(out[0], dtype=np.float64)
        # Tolerance leaves room for bf16 MXU passes if the backend chooses them
        # at default matmul precision; still far below any semantic error
        # (wrong mean/std, wrong resize taps, misplaced padding).
        np.testing.assert_allclose(got, ref, rtol=5e-3, atol=2e-2)
        # Padded region must be EXACTLY zero.
        assert np.all(got[:, Hout:, :] == 0.0)
        assert np.all(got[:, :, Wout:] == 0.0)

    print("KERNEL_OK")
</pallas_src>

<mosaic_0001>
module attributes {stable_mosaic.version = 11 : i64} {
  func.func @kernel(%arg0: i32, %arg1: i32, %arg2: memref<1x8x20xbf16, #tpu.memory_space<vmem>>, %arg3: memref<6x8xf32, #tpu.memory_space<vmem>>, %arg4: memref<20x16xf32, #tpu.memory_space<vmem>>, %arg5: memref<3xf32, #tpu.memory_space<smem>>, %arg6: memref<3xf32, #tpu.memory_space<smem>>, %arg7: memref<1x16x16xf32, #tpu.memory_space<vmem>>) attributes {dimension_semantics = [#tpu.dimension_semantics<parallel>, #tpu.dimension_semantics<parallel>], iteration_bounds = array<i64: 3, 1>, scalar_prefetch = 0 : i64, scratch_operands = 0 : i64, tpu.core_type = #tpu.core_type<tc>, window_params = [{transform_indices = @transform_0, window_bounds = array<i64: 1, 8, 20>}, {pipeline_mode = #tpu.pipeline_mode<synchronous>, transform_indices = @transform_1, window_bounds = array<i64: 6, 8>}, {transform_indices = @transform_2, window_bounds = array<i64: 20, 16>}, {transform_indices = @transform_3, window_bounds = array<i64: 3>}, {transform_indices = @transform_4, window_bounds = array<i64: 3>}, {transform_indices = @transform_5, window_bounds = array<i64: 1, 16, 16>}]} {
    %c0 = arith.constant 0 : index
    %c0_0 = arith.constant 0 : index
    %c0_1 = arith.constant 0 : index
    %0 = vector.load %arg2[%c0, %c0_0, %c0_1] : memref<1x8x20xbf16, #tpu.memory_space<vmem>>, vector<1x8x20xbf16>
    %1 = vector.shape_cast %0 : vector<1x8x20xbf16> to vector<8x20xbf16>
    %2 = arith.extf %1 : vector<8x20xbf16> to vector<8x20xf32>
    %c0_2 = arith.constant 0 : index
    %c0_3 = arith.constant 0 : index
    %3 = vector.load %arg4[%c0_2, %c0_3] : memref<20x16xf32, #tpu.memory_space<vmem>>, vector<20x16xf32>
    %cst = arith.constant dense<0.000000e+00> : vector<8x16xf32>
    %4 = tpu.matmul %2, %3, %cst {dimension_numbers = #tpu.dot_dimension_numbers<[1], [0], [0], [1], [0, 0, 1, 1], [], []>} : vector<8x20xf32>, vector<20x16xf32>, vector<8x16xf32> -> vector<8x16xf32>
    %5 = arith.index_cast %arg0 : i32 to index
    %6 = memref.load %arg5[%5] : memref<3xf32, #tpu.memory_space<smem>>
    %7 = vector.broadcast %6 : f32 to vector<8x16xf32>
    %8 = arith.subf %4, %7 : vector<8x16xf32>
    %9 = arith.index_cast %arg0 : i32 to index
    %10 = memref.load %arg6[%9] : memref<3xf32, #tpu.memory_space<smem>>
    %11 = vector.broadcast %10 : f32 to vector<8x16xf32>
    %12 = arith.mulf %8, %11 : vector<8x16xf32>
    %c0_4 = arith.constant 0 : index
    %c0_5 = arith.constant 0 : index
    %13 = vector.load %arg3[%c0_4, %c0_5] : memref<6x8xf32, #tpu.memory_space<vmem>>, vector<6x8xf32>
    %cst_6 = arith.constant dense<0.000000e+00> : vector<6x16xf32>
    %14 = tpu.matmul %13, %12, %cst_6 {dimension_numbers = #tpu.dot_dimension_numbers<[1], [0], [0], [1], [0, 0, 1, 1], [], []>} : vector<6x8xf32>, vector<8x16xf32>, vector<6x16xf32> -> vector<6x16xf32>
    %c0_7 = arith.constant 0 : index
    %c0_8 = arith.constant 0 : index
    %c0_9 = arith.constant 0 : index
    %15 = vector.load %arg7[%c0_7, %c0_8, %c0_9] : memref<1x16x16xf32, #tpu.memory_space<vmem>>, vector<1x6x16xf32>
    %16 = vector.shape_cast %15 : vector<1x6x16xf32> to vector<6x16xf32>
    %17 = vector.shape_cast %14 : vector<6x16xf32> to vector<1x6x16xf32>
    tpu.vector_store %arg7[%c0_7, %c0_8, %c0_9], %17 {strides = array<i32>} : memref<1x16x16xf32, #tpu.memory_space<vmem>>, vector<1x6x16xf32>,
    %cst_10 = arith.constant 0.000000e+00 : f32
    %18 = vector.broadcast %cst_10 : f32 to vector<10x16xf32>
    %c0_11 = arith.constant 0 : index
    %c6 = arith.constant 6 : index
    %c0_12 = arith.constant 0 : index
    %19 = vector.load %arg7[%c0_11, %c6, %c0_12] : memref<1x16x16xf32, #tpu.memory_space<vmem>>, vector<1x10x16xf32>
    %20 = vector.shape_cast %19 : vector<1x10x16xf32> to vector<10x16xf32>
    %21 = vector.shape_cast %18 : vector<10x16xf32> to vector<1x10x16xf32>
    tpu.vector_store %arg7[%c0_11, %c6, %c0_12], %21 {strides = array<i32>} : memref<1x16x16xf32, #tpu.memory_space<vmem>>, vector<1x10x16xf32>,
    return
  }
  func.func @transform_0(%arg0: i32, %arg1: i32) -> (i32, i32, i32) {
    %c0_i32 = arith.constant 0 : i32
    %c0_i32_0 = arith.constant 0 : i32
    %c0_i32_1 = arith.constant 0 : i32
    return %arg0, %c0_i32, %c0_i32_0 : i32, i32, i32
  }
  func.func @transform_1(%arg0: i32, %arg1: i32) -> (i32, i32) {
    %c0_i32 = arith.constant 0 : i32
    %c0_i32_0 = arith.constant 0 : i32
    %c0_i32_1 = arith.constant 0 : i32
    return %c0_i32, %c0_i32_0 : i32, i32
  }
  func.func @transform_2(%arg0: i32, %arg1: i32) -> (i32, i32) {
    %c0_i32 = arith.constant 0 : i32
    %c0_i32_0 = arith.constant 0 : i32
    return %c0_i32, %arg1 : i32, i32
  }
  func.func @transform_3(%arg0: i32, %arg1: i32) -> i32 {
    %c0_i32 = arith.constant 0 : i32
    %c0_i32_0 = arith.constant 0 : i32
    return %c0_i32 : i32
  }
  func.func @transform_4(%arg0: i32, %arg1: i32) -> i32 {
    %c0_i32 = arith.constant 0 : i32
    %c0_i32_0 = arith.constant 0 : i32
    return %c0_i32 : i32
  }
  func.func @transform_5(%arg0: i32, %arg1: i32) -> (i32, i32, i32) {
    %c0_i32 = arith.constant 0 : i32
    %c0_i32_0 = arith.constant 0 : i32
    return %arg0, %c0_i32, %arg1 : i32, i32, i32
  }
}

</mosaic_0001>

<llo_original>
// kernel: tpu_custom_call.1
$region0: #{tpu_custom_call.1}
  #allocation0 [shape = 'u32[]', space=smem, size = 0x4, offset = 0x4, fixed_abs, tag = 'smem constant byte address 0x4 - core index']
  #allocation1 [shape = 'u32[144,128]{1,0:T(1,128)}', space=vmem, size = 0x12000, scoped, tag = 'internal scratch']
  %s0 = inlined_call_operand.vmem [shape: bf16[3,8,20], index: 0, kind: input, shape index: {}]
  %s1 = inlined_call_operand.vmem [shape: f32[6,8], index: 1, kind: input, shape index: {}]
  %s2 = inlined_call_operand.vmem [shape: f32[20,16], index: 2, kind: input, shape index: {}]
  %s3 = inlined_call_operand.vmem [shape: f32[3], index: 3, kind: input, shape index: {}]
  %s4 = inlined_call_operand.vmem [shape: f32[3], index: 4, kind: input, shape index: {}]
  %s5 = inlined_call_operand.hbm [shape: f32[3,16,16], index: 5, kind: output, shape index: {}]
  %s6 = sld [smem:[#allocation0]]
  $region61: #{tpu_custom_call.1} parent=0
    _
  %s8 = ssub.s32 1, %s6
  %s9 = scalar_select 0, %s8, %s6
  $region1: #{tpu_custom_call.1} parent=0
    #allocation2 [shape = 'u8[512]{0}', space=smem, size = 0x200, scoped, tag = 'input window, operand 3, single buffered']
    #allocation3 [shape = 's32[2]{0}', space=sflag, size = 0x8, scoped, tag = 'scoped memory for tpu_custom_call.1']
    #allocation4 [shape = 's32[2]{0}', space=sflag, size = 0x8, scoped, tag = 'scoped memory for tpu_custom_call.1']
    #allocation5 [shape = 'u8[512]{0}', space=smem, size = 0x200, scoped, tag = 'input window, operand 4, single buffered']
    #allocation6 [shape = 's32[1]{0}', space=sflag, size = 0x4, scoped, tag = 'scoped memory for tpu_custom_call.1']
    #allocation7 [shape = 'u8[16384]{0}', space=vmem, size = 0x4000, scoped, tag = 'output window, operand 0']
    %10 = vsyncpa [#allocation4], 0
    %11 = vsyncpa [#allocation6], 0
    %12 = vsyncpa [#allocation3], 0
    %s13 = scalar_lea.sflag [#allocation3], 1
    %14 = vsyncpa %s13, 0
    loop: start=0, step=1, limit=5
    $region2: #{tpu_custom_call.1} parent=1 // loop_pre_header
      _
    $region3: #{tpu_custom_call.1} parent=1 // loop_header
      %s16 = sphi 0, %s20
      %p17 = scmp.ge.s32.totalorder %s16, 5
      %s23 = sphi 0, %s35
      %s24 = sphi 0, %s31
      %s25 = sphi 0, %s23
      %s26 = sphi 0, %s24
      %s27 = sphi 0, %s25
      %s28 = sphi 0, %s26
      %s38 = sphi 0, %s40
      %s41 = sphi 0, %s38
      %s42 = sphi 0, %s41
      %s58 = sphi 0, %s42
      %s62 = sphi 0, %s62
      %s64 = sphi 0, %s62
      %s65 = sphi 0, %s64
      %s79 = sphi 0, %s65
      %s85 = sphi 0, %s87
      %s88 = sphi 0, %s85
      %s89 = sphi 0, %s88
      %s105 = sphi 0, %s89
      %s109 = sphi 0, %s109
      %s111 = sphi 0, %s109
      %s112 = sphi 0, %s111
      %s126 = sphi 0, %s112
      %s130 = sphi 0, %s130
      %s132 = sphi 0, %s130
      %s133 = sphi 0, %s132
      %s147 = sphi 0, %s133
      %s155 = sphi 0, %s157
      %s158 = sphi 0, %s155
      %s159 = sphi 0, %s158
      %s175 = sphi 0, %s159
    $region4: #{tpu_custom_call.1} parent=1 // loop_header_branch
      %19 = sbr.rel (%p17) target = $region8
    $region5: #{tpu_custom_call.1} parent=1 // loop_body
      %s21 = ssub.s32 %s16, 1
      %s22 = ssub.s32 %s16, 2
      %s29 = sadd.s32 1, %s24
      %p30 = scmp.ge.s32.totalorder %s29, 1
      %s31 = scalar_select %p30, 0, %s29
      %s32 = sadd.s32 1, %s23
      %s33 = scalar_select %p30, %s32, %s23
      %p34 = scmp.ge.s32.totalorder %s33, 3
      %s35 = scalar_select %p34, 0, %s33
      %s36 = ssub.s32 %s23, %s35
      %p37 = scmp.eq.s32.totalorder %s36, 0
      %s39 = sadd.s32 %s38, 1
      %s40 = scalar_select %p37, %s38, %s39
      %p43 = pneg %p37
      %p44 = scmp.eq.s32.totalorder %s16, 2
      %p45 = por %p43, %p44
      %p46 = scmp.ne.s32.totalorder %s38, %s41
      %p47 = scmp.eq.s32.totalorder %s16, 0
      %p48 = por %p46, %p47
      %p49 = scmp.ne.s32.totalorder %s38, %s41
      %p50 = scmp.eq.s32.totalorder %s21, 2
      %p51 = por %p49, %p50
      %p52 = scmp.ne.s32.totalorder %s41, %s42
      %p53 = scmp.eq.s32.totalorder %s21, 0
      %p54 = por %p52, %p53
      %p55 = scmp.ne.s32.totalorder %s41, %s42
      %p56 = scmp.eq.s32.totalorder %s22, 2
      %p57 = por %p55, %p56
      %p59 = scmp.ne.s32.totalorder %s42, %s58
      %p60 = scmp.eq.s32.totalorder %s22, 0
      %p61 = por %p59, %p60
      %s63 = sadd.s32 %s62, 1
      %p66 = scmp.eq.s32.totalorder %s16, 2
      %p67 = scmp.ne.s32.totalorder %s62, %s64
      %p68 = scmp.eq.s32.totalorder %s16, 0
      %p69 = por %p67, %p68
      %p70 = scmp.ne.s32.totalorder %s62, %s64
      %p71 = scmp.eq.s32.totalorder %s21, 2
      %p72 = por %p70, %p71
      %p73 = scmp.ne.s32.totalorder %s64, %s65
      %p74 = scmp.eq.s32.totalorder %s21, 0
      %p75 = por %p73, %p74
      %p76 = scmp.ne.s32.totalorder %s64, %s65
      %p77 = scmp.eq.s32.totalorder %s22, 2
      %p78 = por %p76, %p77
      %p80 = scmp.ne.s32.totalorder %s65, %s79
      %p81 = scmp.eq.s32.totalorder %s22, 0
      %p82 = por %p80, %p81
      %s83 = ssub.s32 %s24, %s31
      %p84 = scmp.eq.s32.totalorder %s83, 0
      %s86 = sadd.s32 %s85, 1
      %s87 = scalar_select %p84, %s85, %s86
      %p90 = pneg %p84
      %p91 = scmp.eq.s32.totalorder %s16, 2
      %p92 = por %p90, %p91
      %p93 = scmp.ne.s32.totalorder %s85, %s88
      %p94 = scmp.eq.s32.totalorder %s16, 0
      %p95 = por %p93, %p94
      %p96 = scmp.ne.s32.totalorder %s85, %s88
      %p97 = scmp.eq.s32.totalorder %s21, 2
      %p98 = por %p96, %p97
      %p99 = scmp.ne.s32.totalorder %s88, %s89
      %p100 = scmp.eq.s32.totalorder %s21, 0
      %p101 = por %p99, %p100
      %p102 = scmp.ne.s32.totalorder %s88, %s89
      %p103 = scmp.eq.s32.totalorder %s22, 2
      %p104 = por %p102, %p103
      %p106 = scmp.ne.s32.totalorder %s89, %s105
      %p107 = scmp.eq.s32.totalorder %s22, 0
      %p108 = por %p106, %p107
      %s110 = sadd.s32 %s109, 1
      %p113 = scmp.eq.s32.totalorder %s16, 2
      %p114 = scmp.ne.s32.totalorder %s109, %s111
      %p115 = scmp.eq.s32.totalorder %s16, 0
      %p116 = por %p114, %p115
      %p117 = scmp.ne.s32.totalorder %s109, %s111
      %p118 = scmp.eq.s32.totalorder %s21, 2
      %p119 = por %p117, %p118
      %p120 = scmp.ne.s32.totalorder %s111, %s112
      %p121 = scmp.eq.s32.totalorder %s21, 0
      %p122 = por %p120, %p121
      %p123 = scmp.ne.s32.totalorder %s111, %s112
      %p124 = scmp.eq.s32.totalorder %s22, 2
      %p125 = por %p123, %p124
      %p127 = scmp.ne.s32.totalorder %s112, %s126
      %p128 = scmp.eq.s32.totalorder %s22, 0
      %p129 = por %p127, %p128
      %s131 = sadd.s32 %s130, 1
      %p134 = scmp.eq.s32.totalorder %s16, 2
      %p135 = scmp.ne.s32.totalorder %s130, %s132
      %p136 = scmp.eq.s32.totalorder %s16, 0
      %p137 = por %p135, %p136
      %p138 = scmp.ne.s32.totalorder %s130, %s132
      %p139 = scmp.eq.s32.totalorder %s21, 2
      %p140 = por %p138, %p139
      %p141 = scmp.ne.s32.totalorder %s132, %s133
      %p142 = scmp.eq.s32.totalorder %s21, 0
      %p143 = por %p141, %p142
      %p144 = scmp.ne.s32.totalorder %s132, %s133
      %p145 = scmp.eq.s32.totalorder %s22, 2
      %p146 = por %p144, %p145
      %p148 = scmp.ne.s32.totalorder %s133, %s147
      %p149 = scmp.eq.s32.totalorder %s22, 0
      %p150 = por %p148, %p149
      %s151 = ssub.s32 %s23, %s35
      %s152 = ssub.s32 %s24, %s31
      %s153 = sor.u32 %s151, %s152
      %p154 = scmp.eq.s32.totalorder %s153, 0
      %s156 = sadd.s32 %s155, 1
      %s157 = scalar_select %p154, %s155, %s156
      %p160 = pneg %p154
      %p161 = scmp.eq.s32.totalorder %s16, 2
      %p162 = por %p160, %p161
      %p163 = scmp.ne.s32.totalorder %s155, %s158
      %p164 = scmp.eq.s32.totalorder %s16, 0
      %p165 = por %p163, %p164
      %p166 = scmp.ne.s32.totalorder %s155, %s158
      %p167 = scmp.eq.s32.totalorder %s21, 2
      %p168 = por %p166, %p167
      %p169 = scmp.ne.s32.totalorder %s158, %s159
      %p170 = scmp.eq.s32.totalorder %s21, 0
      %p171 = por %p169, %p170
      %p172 = scmp.ne.s32.totalorder %s158, %s159
      %p173 = scmp.eq.s32.totalorder %s22, 2
      %p174 = por %p172, %p173
      %p176 = scmp.ne.s32.totalorder %s159, %s175
      %p177 = scmp.eq.s32.totalorder %s22, 0
      %p178 = por %p176, %p177
      %p179 = scmp.le.s32.totalorder 1, %s16
      %p180 = scmp.lt.s32.totalorder %s16, 4
      %p181 = pnand %p179, %p180
      %p182 = pneg %p181
      // Predicated region
      $region9: #{tpu_custom_call.1} parent=5 // pred_check
        _
      $region10: #{tpu_custom_call.1} parent=5 // pred_check_branch
        %184 = sbr.rel (%p181) target = $region12
      $region11: #{tpu_custom_call.1} parent=5 // pred_region
        %s185 = ssub.s32 %s16, 1
        // Predicated region
        $region13: #{tpu_custom_call.1} parent=11 // pred_check
          %p186 = pneg %p75
        $region14: #{tpu_custom_call.1} parent=11 // pred_check_branch
          %188 = sbr.rel (%p186) target = $region16
        $region15: #{tpu_custom_call.1} parent=11 // pred_region
          _
        $region16: #{tpu_custom_call.1} parent=11 // pred_fallthru
          _
        // Predicated region
        $region17: #{tpu_custom_call.1} parent=11 // pred_check
          %p189 = pneg %p101
        $region18: #{tpu_custom_call.1} parent=11 // pred_check_branch
          %191 = sbr.rel (%p189) target = $region20
        $region19: #{tpu_custom_call.1} parent=11 // pred_region
          %p192 = scmp.lt.s32.totalorder %s26, 0
          %s193 = scalar_select %p192, %s26, 0
          %s194 = smul.addr %s193, 8
          %s195 = scalar_lea.vmem %s2, %s194
        $region20: #{tpu_custom_call.1} parent=11 // pred_fallthru
          _
        // Predicated region
        $region21: #{tpu_custom_call.1} parent=11 // pred_check
          %p196 = pneg %p122
        $region22: #{tpu_custom_call.1} parent=11 // pred_check_branch
          %198 = sbr.rel (%p196) target = $region24
        $region23: #{tpu_custom_call.1} parent=11 // pred_region
          %s200 = ssub.s32 16, 16
          %201 = vsyncadd [#allocation4], %s200
          %s203 = sshll.u32 %s3, 4
          %s204 = int_to_ptr.vmem [resolvable:$true] %s203
          %206 = dma.vmem_to_smem %s204, 16, [#allocation2], [#allocation4]
        $region24: #{tpu_custom_call.1} parent=11 // pred_fallthru
          _
        // Predicated region
        $region25: #{tpu_custom_call.1} parent=11 // pred_check
          %p207 = pneg %p143
        $region26: #{tpu_custom_call.1} parent=11 // pred_check_branch
          %209 = sbr.rel (%p207) target = $region28
        $region27: #{tpu_custom_call.1} parent=11 // pred_region
          %s211 = ssub.s32 16, 16
          %212 = vsyncadd [#allocation6], %s211
          %s214 = sshll.u32 %s4, 4
          %s215 = int_to_ptr.vmem [resolvable:$true] %s214
          %217 = dma.vmem_to_smem %s215, 16, [#allocation5], [#allocation6]
        $region28: #{tpu_custom_call.1} parent=11 // pred_fallthru
          _
      $region12: #{tpu_custom_call.1} parent=5 // pred_fallthru
        _
      %p218 = scmp.lt.s32.totalorder %s16, 3
      // Predicated region
      $region29: #{tpu_custom_call.1} parent=5 // pred_check
        %p219 = pneg %p218
      $region30: #{tpu_custom_call.1} parent=5 // pred_check_branch
        %221 = sbr.rel (%p219) target = $region32
      $region31: #{tpu_custom_call.1} parent=5 // pred_region
        // Predicated region
        $region33: #{tpu_custom_call.1} parent=31 // pred_check
          %p222 = pneg %p48
        $region34: #{tpu_custom_call.1} parent=31 // pred_check_branch
          %224 = sbr.rel (%p222) target = $region36
        $region35: #{tpu_custom_call.1} parent=31 // pred_region
          %p225 = scmp.lt.s32.totalorder %s23, 2
          %s226 = scalar_select %p225, %s23, 2
          %s227 = smul.addr %s226, 4
          %s228 = scalar_lea.vmem %s0, %s227
        $region36: #{tpu_custom_call.1} parent=31 // pred_fallthru
          _
      $region32: #{tpu_custom_call.1} parent=5 // pred_fallthru
        _
      %p229 = scmp.le.s32.totalorder 1, %s16
      %p230 = scmp.lt.s32.totalorder %s16, 4
      %p231 = pnand %p229, %p230
      %p232 = pneg %p231
      // Predicated region
      $region37: #{tpu_custom_call.1} parent=5 // pred_check
        _
      $region38: #{tpu_custom_call.1} parent=5 // pred_check_branch
        %234 = sbr.rel (%p231) target = $region40
      $region39: #{tpu_custom_call.1} parent=5 // pred_region
        %s235 = ssub.s32 %s16, 1
        // Predicated region
        $region41: #{tpu_custom_call.1} parent=39 // pred_check
          %p236 = pneg %p122
        $region42: #{tpu_custom_call.1} parent=39 // pred_check_branch
          %238 = sbr.rel (%p236) target = $region44
        $region43: #{tpu_custom_call.1} parent=39 // pred_region
          %239 = dma.done [#allocation4], 16
        $region44: #{tpu_custom_call.1} parent=39 // pred_fallthru
          _
        // Predicated region
        $region45: #{tpu_custom_call.1} parent=39 // pred_check
          %p240 = pneg %p143
        $region46: #{tpu_custom_call.1} parent=39 // pred_check_branch
          %242 = sbr.rel (%p240) target = $region48
        $region47: #{tpu_custom_call.1} parent=39 // pred_region
          %243 = dma.done [#allocation6], 16
        $region48: #{tpu_custom_call.1} parent=39 // pred_fallthru
          _
        %244 = sfence
        %p245 = scmp.lt.s32.totalorder %s25, 2
        %s246 = scalar_select %p245, %s25, 2
        %s247 = smul.addr %s246, 4
        %s248 = scalar_lea.vmem %s0, %s247
        %p249 = pneg %p54
        %p250 = pneg %p51
        %p251 = pneg %p75
        %p252 = pneg %p72
        %p253 = scmp.lt.s32.totalorder %s26, 0
        %s254 = scalar_select %p253, %s26, 0
        %s255 = smul.addr %s254, 8
        %s256 = scalar_lea.vmem %s2, %s255
        %p257 = pneg %p101
        %p258 = pneg %p98
        %p259 = pneg %p122
        %p260 = pneg %p119
        %p261 = pneg %p143
        %p262 = pneg %p140
        %p263 = pneg %p171
        %p264 = pneg %p168
        %s265 = sand.u32 %s158, 1
        %s266 = scalar_lea.sflag [#allocation3], %s265
        %s267 = sand.u32 %s158, 1
        %s268 = smul.addr %s267, 16
        %s269 = scalar_lea.vmem [#allocation7], %s268
        %p270 = scmp.lt.s32.totalorder %s25, 2
        %s271 = scalar_select %p270, %s25, 2
        %s272 = smul.addr %s271, 4
        %s273 = scalar_lea.vmem %s0, %s272
        %p274 = scmp.lt.s32.totalorder %s26, 0
        %s275 = scalar_select %p274, %s26, 0
        %s276 = smul.addr %s275, 8
        %s277 = scalar_lea.vmem %s2, %s276
        %v278 = vld [vmem:[%s273] sm:$0xf]
        %v279 = vunpack.c.l.bf16 %v278
        %v280 = vld [vmem:[%s277] sm:$0xff]
        %v281 = vld [vmem:[%s277 + $0x8] sm:$0xff]
        %v282 = vld [vmem:[%s277 + $0x10] sm:$0xf]
        %vm283 = vcmask 162816
        %v285 = vsel %vm283, %v279, 0
        %vm287 = vcmask 1043456
        %v289 = vsel %vm287, %v282, 0
        %291 = vmatprep.subr.mxu0 0.0
        %292 = vmatpush1.msra.mxu0 %v280
        %293 = vmatprep.subr.mxu0 0.0
        %294 = vmatpush1.msra.mxu0 %v281
        %295 = vmatprep.subr.mxu0 0.0
        %296 = vmatpush1.msra.mxu0 %v289
        %297 = vmatprep.subr.mxu0 0.0
        %298 = vmatpush1.msra.mxu0 0.0
        %299 = vmatprep.subr.mxu0 0.0
        %300 = vmatpush1.msra.mxu0 0.0
        %301 = vmatprep.subr.mxu0 0.0
        %302 = vmatpush1.msra.mxu0 0.0
        %303 = vmatprep.subr.mxu0 0.0
        %304 = vmatpush1.msra.mxu0 0.0
        %305 = vmatprep.subr.mxu0 0.0
        %306 = vmatpush1.msra.mxu0 0.0
        %307 = vmatprep.subr.mxu0 0.0
        %308 = vmatpush1.msra.mxu0 0.0
        %309 = vmatprep.subr.mxu0 0.0
        %310 = vmatpush1.msra.mxu0 0.0
        %311 = vmatprep.subr.mxu0 0.0
        %312 = vmatpush1.msra.mxu0 0.0
        %313 = vmatprep.subr.mxu0 0.0
        %314 = vmatpush1.msra.mxu0 0.0
        %315 = vmatprep.subr.mxu0 0.0
        %316 = vmatpush1.msra.mxu0 0.0
        %317 = vmatprep.subr.mxu0 0.0
        %318 = vmatpush1.msra.mxu0 0.0
        %319 = vmatprep.subr.mxu0 0.0
        %320 = vmatpush1.msra.mxu0 0.0
        %321 = vmatprep.subr.mxu0 0.0
        %322 = vmatpush1.msra.mxu0 0.0
        %323 = vmatprep.subr.mxu0 0.0
        %324 = vmatpush1.msra.mxu0 0.0
        %325 = vmatprep.subr.mxu0 0.0
        %326 = vmatpush1.msra.mxu0 0.0
        %327 = vmatprep.subr.mxu0 0.0
        %328 = vmatpush1.msra.mxu0 0.0
        %329 = vmatprep.subr.mxu0 0.0
        %330 = vmatpush1.msra.mxu0 0.0
        %331 = vmatprep.subr.mxu0 0.0
        %332 = vmatpush1.msra.mxu0 0.0
        %333 = vmatprep.subr.mxu0 0.0
        %334 = vmatpush1.msra.mxu0 0.0
        %335 = vmatprep.subr.mxu0 0.0
        %336 = vmatpush1.msra.mxu0 0.0
        %337 = vmatprep.subr.mxu0 0.0
        %338 = vmatpush1.msra.mxu0 0.0
        %339 = vmatprep.subr.mxu0 0.0
        %340 = vmatpush1.msra.mxu0 0.0
        %341 = vmatprep.subr.mxu0 0.0
        %342 = vmatpush1.msra.mxu0 0.0
        %343 = vmatprep.subr.mxu0 0.0
        %344 = vmatpush1.msra.mxu0 0.0
        %345 = vmatprep.subr.mxu0 0.0
        %346 = vmatpush1.msra.mxu0 0.0
        %347 = vmatprep.subr.mxu0 0.0
        %348 = vmatpush1.msra.mxu0 0.0
        %349 = vmatprep.subr.mxu0 0.0
        %350 = vmatpush1.msra.mxu0 0.0
        %351 = vmatprep.subr.mxu0 0.0
        %352 = vmatpush1.msra.mxu0 0.0
        %353 = vmatprep.subr.mxu0 0.0
        %354 = vmatpush1.msra.mxu0 0.0
        %355 = vmatprep.mubr.f32.mxu0 0.0
        %356 = vmatmul.mubr.f32.gmra.mrb[0].mxu0 %v285
        %v357 = vpop.f32.mrb[0].mxu0
        %v358 = vadd.f32 0.0, %v357
        %v359 = vpop.f32.mrb[0].mxu0
        %360 = vdwg.mxu0
        %s361 = sld [smem:[#allocation2 + %s25]]
        %v362 = vstv %s361
        %v363 = vsub.f32 %v358, %v362
        %s364 = sld [smem:[#allocation5 + %s25]]
        %v365 = vstv %s364
        %v366 = vmul.f32 %v363, %v365
        %v367 = vld [vmem:[%s1] sm:$0x3f]
        %vm368 = vcmask 64512
        %v370 = vsel %vm368, %v367, 0
        %372 = vmatprep.subr.mxu0 0.0
        %373 = vmatpush1.msra.mxu0 %v366
        %374 = vmatprep.subr.mxu0 0.0
        %375 = vmatpush1.msra.mxu0 0.0
        %376 = vmatprep.subr.mxu0 0.0
        %377 = vmatpush1.msra.mxu0 0.0
        %378 = vmatprep.subr.mxu0 0.0
        %379 = vmatpush1.msra.mxu0 0.0
        %380 = vmatprep.subr.mxu0 0.0
        %381 = vmatpush1.msra.mxu0 0.0
        %382 = vmatprep.subr.mxu0 0.0
        %383 = vmatpush1.msra.mxu0 0.0
        %384 = vmatprep.subr.mxu0 0.0
        %385 = vmatpush1.msra.mxu0 0.0
        %386 = vmatprep.subr.mxu0 0.0
        %387 = vmatpush1.msra.mxu0 0.0
        %388 = vmatprep.subr.mxu0 0.0
        %389 = vmatpush1.msra.mxu0 0.0
        %390 = vmatprep.subr.mxu0 0.0
        %391 = vmatpush1.msra.mxu0 0.0
        %392 = vmatprep.subr.mxu0 0.0
        %393 = vmatpush1.msra.mxu0 0.0
        %394 = vmatprep.subr.mxu0 0.0
        %395 = vmatpush1.msra.mxu0 0.0
        %396 = vmatprep.subr.mxu0 0.0
        %397 = vmatpush1.msra.mxu0 0.0
        %398 = vmatprep.subr.mxu0 0.0
        %399 = vmatpush1.msra.mxu0 0.0
        %400 = vmatprep.subr.mxu0 0.0
        %401 = vmatpush1.msra.mxu0 0.0
        %402 = vmatprep.subr.mxu0 0.0
        %403 = vmatpush1.msra.mxu0 0.0
        %404 = vmatprep.subr.mxu0 0.0
        %405 = vmatpush1.msra.mxu0 0.0
        %406 = vmatprep.subr.mxu0 0.0
        %407 = vmatpush1.msra.mxu0 0.0
        %408 = vmatprep.subr.mxu0 0.0
        %409 = vmatpush1.msra.mxu0 0.0
        %410 = vmatprep.subr.mxu0 0.0
        %411 = vmatpush1.msra.mxu0 0.0
        %412 = vmatprep.subr.mxu0 0.0
        %413 = vmatpush1.msra.mxu0 0.0
        %414 = vmatprep.subr.mxu0 0.0
        %415 = vmatpush1.msra.mxu0 0.0
        %416 = vmatprep.subr.mxu0 0.0
        %417 = vmatpush1.msra.mxu0 0.0
        %418 = vmatprep.subr.mxu0 0.0
        %419 = vmatpush1.msra.mxu0 0.0
        %420 = vmatprep.subr.mxu0 0.0
        %421 = vmatpush1.msra.mxu0 0.0
        %422 = vmatprep.subr.mxu0 0.0
        %423 = vmatpush1.msra.mxu0 0.0
        %424 = vmatprep.subr.mxu0 0.0
        %425 = vmatpush1.msra.mxu0 0.0
        %426 = vmatprep.subr.mxu0 0.0
        %427 = vmatpush1.msra.mxu0 0.0
        %428 = vmatprep.subr.mxu0 0.0
        %429 = vmatpush1.msra.mxu0 0.0
        %430 = vmatprep.subr.mxu0 0.0
        %431 = vmatpush1.msra.mxu0 0.0
        %432 = vmatprep.subr.mxu0 0.0
        %433 = vmatpush1.msra.mxu0 0.0
        %434 = vmatprep.subr.mxu0 0.0
        %435 = vmatpush1.msra.mxu0 0.0
        %436 = vmatprep.mubr.f32.mxu0 0.0
        %437 = vmatmul.mubr.f32.gmra.mrb[0].mxu0 %v370
        %v438 = vpop.f32.mrb[0].mxu0
        %v439 = vadd.f32 0.0, %v438
        %v440 = vpop.f32.mrb[0].mxu0
        %441 = vdwg.mxu0
        %vm442 = vcmask 128000
        %443 = vst.msk [vmem:[%s269] sm:$0x3f] %vm442, %v439
        %vm444 = vcmask 130048
        %445 = vst.msk [vmem:[%s269 + $0x6] sm:$0xff] %vm444, 0.0
        %vm446 = vcmask 123904
        %447 = vst.msk [vmem:[%s269 + $0xe] sm:$0x3] %vm446, 0.0
        %s448 = sand.u32 %s158, 1
        %s449 = scalar_lea.sflag [#allocation3], %s448
        %s450 = sand.u32 %s158, 1
        %s451 = smul.addr %s450, 16
        %s452 = scalar_lea.vmem [#allocation7], %s451
        // Predicated region
        $region49: #{tpu_custom_call.1} parent=39 // pred_check
          %p453 = pneg %p168
        $region50: #{tpu_custom_call.1} parent=39 // pred_check_branch
          %455 = sbr.rel (%p453) target = $region52
        $region51: #{tpu_custom_call.1} parent=39 // pred_region
          %s457 = ssub.s32 256, 256
          %458 = vsyncadd %s449, %s457
          %s459 = smul.addr %s25, 2
          %s460 = sadd.s32 %s26, %s459
          %s461 = smul.addr %s460, 128
          %s462 = scalar_lea.hbm %s5, %s461
          %s463 = sshll.u32 %s452, 4
          %s464 = int_to_ptr.vmem [resolvable:$true] %s463
          %469 = dma.vmem_to_hbm [thread:$0]  %s464, 256, %s462, %s449, 128, 128, 8
        $region52: #{tpu_custom_call.1} parent=39 // pred_fallthru
          _
      $region40: #{tpu_custom_call.1} parent=5 // pred_fallthru
        _
      %p470 = scmp.le.s32.totalorder 2, %s16
      // Predicated region
      $region53: #{tpu_custom_call.1} parent=5 // pred_check
        %p471 = pneg %p470
      $region54: #{tpu_custom_call.1} parent=5 // pred_check_branch
        %473 = sbr.rel (%p471) target = $region56
      $region55: #{tpu_custom_call.1} parent=5 // pred_region
        %s474 = ssub.s32 %s16, 2
        // Predicated region
        $region57: #{tpu_custom_call.1} parent=55 // pred_check
          %p475 = pneg %p174
        $region58: #{tpu_custom_call.1} parent=55 // pred_check_branch
          %477 = sbr.rel (%p475) target = $region60
        $region59: #{tpu_custom_call.1} parent=55 // pred_region
          %s478 = sand.u32 %s159, 1
          %s479 = scalar_lea.sflag [#allocation3], %s478
          %s480 = sand.u32 %s159, 1
          %s481 = smul.addr %s480, 16
          %s482 = scalar_lea.vmem [#allocation7], %s481
          %483 = dma.done %s479, 256
        $region60: #{tpu_custom_call.1} parent=55 // pred_fallthru
          _
      $region56: #{tpu_custom_call.1} parent=5 // pred_fallthru
        _
    $region6: #{tpu_custom_call.1} parent=1 // loop_footer
      %s20 = sadd.s32 1, %s16
    $region7: #{tpu_custom_call.1} parent=1 // loop_footer_branch
      %15 = sbr.rel target = $region3
    $region8: #{tpu_custom_call.1} parent=1 // loop_exit
      _
    %484 = vsyncpa [#allocation3], 1
    %s485 = scalar_lea.sflag [#allocation3], 1
    %486 = vsyncpa %s485, 1
    %487 = vsyncpa [#allocation4], 1
    %s488 = scalar_lea.sflag [#allocation4], 1
    %489 = vsyncpa %s488, 1
    %490 = vsyncpa [#allocation6], 1

</llo_original>
